<compile_context>
chip_gen: v5e
topology: v5e:2x2
jax: 0.10.0
libtpu: 0.0.40
codegen_flags: <defaults>
</compile_context>

<pallas_src>
import jax
import jax.numpy as jnp
from jax.experimental import pallas as pl
from jax.experimental.pallas import tpu as pltpu


def _round_up(x: int, m: int) -> int:
    return (x + m - 1) // m * m


def _device_kind() -> str:
    try:
        return jax.devices()[0].device_kind.lower()
    except Exception:
        return ""


_DEVICE_KIND = _device_kind()
# v7x has 2 TensorCores per chip; engage both by giving the grid >= 2 steps.
_TWO_TENSORCORES = "v7" in _DEVICE_KIND


def _default_compute_dtype():
    # bf16 operands are native on v6e/v7x MXU/VPU/EUP (halves weight/goal DMA
    # bytes and vreg pressure).  v5e has no bf16 VPU/EUP path: keep f32 there.
    if "v6" in _DEVICE_KIND or "v7" in _DEVICE_KIND:
        return jnp.bfloat16
    return jnp.float32


# ---------------------------------------------------------------------------
# Fused 3-layer MLP kernel body (one batch tile per grid step).
# ---------------------------------------------------------------------------
def _mlp_kernel(x_ref, w1_ref, b1_ref, w2_ref, b2_ref, w3_ref, b3_ref, o_ref):
    # Layer 1: Linear + Tanh (tanh goes to the EUP slot — effectively free).
    h = jnp.tanh(
        jnp.dot(x_ref[...], w1_ref[...], preferred_element_type=jnp.float32)
        + b1_ref[...]
    )
    # Layer 2: Linear + Tanh.
    h = jnp.tanh(
        jnp.dot(h.astype(w2_ref.dtype), w2_ref[...],
                preferred_element_type=jnp.float32)
        + b2_ref[...]
    )
    # Output layer: Linear (no activation).
    o_ref[...] = (
        jnp.dot(h.astype(w3_ref.dtype), w3_ref[...],
                preferred_element_type=jnp.float32)
        + b3_ref[...]
    ).astype(o_ref.dtype)


def prepare_params(params, *, compute_dtype=None):
    """One-time pad + cast of weights/biases (hoisted out of the hot path).

    Zero-padding hidden/out feature dims to 128 lanes is exact: padded W
    columns/rows contribute 0, padded biases are 0, and tanh(0)=0, so padded
    lanes stay exactly zero through the whole MLP.
    """
    w1, b1, w2, b2, w3, b3 = params
    if compute_dtype is None:
        compute_dtype = _default_compute_dtype()

    latent, hidden = w1.shape
    out_dim = w3.shape[1]
    hid_p = _round_up(hidden, 128)
    out_p = _round_up(out_dim, 128)

    def pad2(a, rows, cols):
        a = a if a.ndim == 2 else a.reshape(1, -1)
        return jnp.pad(a, ((0, rows - a.shape[0]), (0, cols - a.shape[1])))

    tensors = (
        pad2(w1, latent, hid_p).astype(compute_dtype),
        pad2(b1, 1, hid_p).astype(jnp.float32),
        pad2(w2, hid_p, hid_p).astype(compute_dtype),
        pad2(b2, 1, hid_p).astype(jnp.float32),
        pad2(w3, hid_p, out_p).astype(compute_dtype),
        pad2(b3, 1, out_p).astype(jnp.float32),
    )
    # Materialize now so the pads/casts never run again per forward call.
    tensors = jax.block_until_ready(tensors)
    return {
        "tensors": tensors,
        "latent": latent,
        "hid_p": hid_p,
        "out_p": out_p,
        "out_dim": out_dim,
        "compute_dtype": compute_dtype,
    }


def goal_to_action_decoder_forward(goal, prepared, *, batch_tile=None):
    """Fused MLP forward.

    goal: (B, latent) array.  `prepared` comes from `prepare_params`.
    Returns (B, out_dim) logits / distribution parameters (same semantics as
    the PyTorch module's forward), in goal.dtype.
    """
    w1p, b1p, w2p, b2p, w3p, b3p = prepared["tensors"]
    latent = prepared["latent"]
    hid_p = prepared["hid_p"]
    out_p = prepared["out_p"]
    out_dim = prepared["out_dim"]
    compute_dtype = prepared["compute_dtype"]

    B, goal_latent = goal.shape
    assert goal_latent == latent, (goal.shape, latent)

    # Sub-32-bit dtypes pack along sublanes: keep batch tiles full-vreg.
    itemsize = jnp.dtype(compute_dtype).itemsize
    sub = 8 if itemsize >= 4 else (16 if itemsize == 2 else 32)

    b_aligned = _round_up(B, sub)
    if batch_tile is None:
        if _TWO_TENSORCORES and b_aligned >= 256:
            # >= 2 grid steps so v7x's second TensorCore gets sharded work.
            batch_tile = _round_up(pl.cdiv(b_aligned, 2), sub)
        else:
            batch_tile = b_aligned
    # Large tiles are cheap (few MB of VMEM even at 2048 rows, well inside
    # v7x's 64 MiB); cap at round_up(B) so at most one tile of padded rows
    # is ever computed.
    batch_tile = max(sub, min(_round_up(batch_tile, sub), b_aligned, 2048))
    B_p = _round_up(B, batch_tile)

    goal_p = goal.astype(compute_dtype)
    if B_p != B:
        goal_p = jnp.pad(goal_p, ((0, B_p - B), (0, 0)))

    grid = (B_p // batch_tile,)
    # Constant index_map: weights/biases stay VMEM-resident; Pallas elides the
    # re-DMA when the block index is unchanged across consecutive grid steps.
    rep = lambda i: (0, 0)

    # Advisory cost estimate so XLA schedules this small custom call sensibly.
    flops = 2 * B_p * (latent * hid_p + hid_p * hid_p + hid_p * out_p)
    transcendentals = 2 * B_p * hid_p
    bytes_accessed = (
        goal_p.size * goal_p.dtype.itemsize
        + sum(a.size * a.dtype.itemsize
              for a in (w1p, b1p, w2p, b2p, w3p, b3p))
        + B_p * out_p * jnp.dtype(goal.dtype).itemsize
    )

    out_padded = pl.pallas_call(
        _mlp_kernel,
        out_shape=jax.ShapeDtypeStruct((B_p, out_p), goal.dtype),
        grid_spec=pl.GridSpec(
            grid=grid,
            in_specs=[
                pl.BlockSpec((batch_tile, latent), lambda i: (i, 0)),  # goal
                pl.BlockSpec((latent, hid_p), rep),                    # W1
                pl.BlockSpec((1, hid_p), rep),                         # b1
                pl.BlockSpec((hid_p, hid_p), rep),                     # W2
                pl.BlockSpec((1, hid_p), rep),                         # b2
                pl.BlockSpec((hid_p, out_p), rep),                     # W3
                pl.BlockSpec((1, out_p), rep),                         # b3
            ],
            out_specs=pl.BlockSpec((batch_tile, out_p), lambda i: (i, 0)),
        ),
        compiler_params=pltpu.CompilerParams(
            dimension_semantics=("parallel",),
        ),
        cost_estimate=pl.CostEstimate(
            flops=flops,
            transcendentals=transcendentals,
            bytes_accessed=bytes_accessed,
        ),
    )(goal_p, w1p, b1p, w2p, b2p, w3p, b3p)

    # TODO(synk): at HBM-roofline batch sizes the 128-lane output padding
    # (16x real bytes for out_dim=8) dominates writeback; a packed
    # (B/16, 128) output layout or masked stores could win there — measure.
    return out_padded[:B, :out_dim]


def init_params(key, latent_dim, hidden_dim, output_dim, dtype=jnp.float32):
    """Deterministic synthetic init (PyTorch-Linear-style uniform ranges)."""
    ks = jax.random.split(key, 6)

    def lin(kw, kb, fan_in, fan_out):
        bound = 1.0 / jnp.sqrt(fan_in)
        w = jax.random.uniform(kw, (fan_in, fan_out), dtype, -bound, bound)
        b = jax.random.uniform(kb, (1, fan_out), dtype, -bound, bound)
        return w, b

    w1, b1 = lin(ks[0], ks[1], latent_dim, hidden_dim)
    w2, b2 = lin(ks[2], ks[3], hidden_dim, hidden_dim)
    w3, b3 = lin(ks[4], ks[5], hidden_dim, output_dim)
    return (w1, b1, w2, b2, w3, b3)


def reference_forward(goal, params):
    """Pure-JAX reference matching the PyTorch nn.Sequential forward."""
    w1, b1, w2, b2, w3, b3 = params
    h = jnp.tanh(goal @ w1 + b1)
    h = jnp.tanh(h @ w2 + b2)
    return h @ w3 + b3


# TODO(synk): get_dist_from_output / sample_from_output (torch.distributions
# sampling) are host-side distribution utilities, not part of forward(); only
# the MLP hot path is implemented as a kernel.

if __name__ == "__main__":
    # Module defaults: latent_space_dim=32, hidden_dim=latent*3=96,
    # action_space_dim=8, action_space_type='categorical' -> output_dim=8.
    batch = 16
    latent_dim = 32
    hidden_dim = latent_dim * 3
    action_dim = 8
    output_dim = action_dim  # categorical

    key = jax.random.PRNGKey(0)
    k_goal, k_params = jax.random.split(key)

    goal = jax.random.normal(k_goal, (batch, latent_dim), dtype=jnp.float32)
    params = init_params(k_params, latent_dim, hidden_dim, output_dim)
    ref = reference_forward(goal, params)

    # --- f32 compute path: exact check against the reference ----------------
    prep_f32 = prepare_params(params, compute_dtype=jnp.float32)
    out = jax.block_until_ready(goal_to_action_decoder_forward(goal, prep_f32))
    assert out.shape == (batch, output_dim), out.shape
    assert jnp.allclose(out, ref, atol=1e-5, rtol=1e-5), (
        f"max abs err {jnp.max(jnp.abs(out - ref))}"
    )

    # --- non-divisible / multi-tile path (wrapper-side batch padding) -------
    batch2 = 37
    goal2 = jax.random.normal(jax.random.PRNGKey(1), (batch2, latent_dim),
                              dtype=jnp.float32)
    out2 = jax.block_until_ready(
        goal_to_action_decoder_forward(goal2, prep_f32, batch_tile=16))
    ref2 = reference_forward(goal2, params)
    assert out2.shape == (batch2, output_dim)
    assert jnp.allclose(out2, ref2, atol=1e-5, rtol=1e-5), (
        f"max abs err {jnp.max(jnp.abs(out2 - ref2))}"
    )

    # --- bf16 operand path (default on v6e/v7x): looser tolerance -----------
    prep_bf16 = prepare_params(params, compute_dtype=jnp.bfloat16)
    out_bf = jax.block_until_ready(
        goal_to_action_decoder_forward(goal, prep_bf16))
    assert out_bf.shape == (batch, output_dim)
    assert jnp.allclose(out_bf, ref, atol=5e-2, rtol=5e-2), (
        f"bf16 max abs err {jnp.max(jnp.abs(out_bf - ref))}"
    )

    # --- device-default path (whatever dtype this chip prefers) -------------
    prep_auto = prepare_params(params)
    out_auto = jax.block_until_ready(
        goal_to_action_decoder_forward(goal, prep_auto))
    assert out_auto.shape == (batch, output_dim)
    assert jnp.allclose(out_auto, ref, atol=5e-2, rtol=5e-2), (
        f"auto max abs err {jnp.max(jnp.abs(out_auto - ref))}"
    )

    print("KERNEL_OK")
</pallas_src>

<mosaic_0001>
module attributes {stable_mosaic.version = 11 : i64} {
  func.func @_mlp_kernel(%arg0: i32, %arg1: memref<16x32xf32, #tpu.memory_space<vmem>>, %arg2: memref<32x128xf32, #tpu.memory_space<vmem>>, %arg3: memref<1x128xf32, #tpu.memory_space<vmem>>, %arg4: memref<128x128xf32, #tpu.memory_space<vmem>>, %arg5: memref<1x128xf32, #tpu.memory_space<vmem>>, %arg6: memref<128x128xf32, #tpu.memory_space<vmem>>, %arg7: memref<1x128xf32, #tpu.memory_space<vmem>>, %arg8: memref<16x128xf32, #tpu.memory_space<vmem>>) attributes {dimension_semantics = [#tpu.dimension_semantics<parallel>], iteration_bounds = array<i64: 1>, scalar_prefetch = 0 : i64, scratch_operands = 0 : i64, tpu.core_type = #tpu.core_type<tc>, window_params = [{transform_indices = @transform_0, window_bounds = array<i64: 16, 32>}, {pipeline_mode = #tpu.pipeline_mode<synchronous>, transform_indices = @transform_1, window_bounds = array<i64: 32, 128>}, {pipeline_mode = #tpu.pipeline_mode<synchronous>, transform_indices = @transform_2, window_bounds = array<i64: 1, 128>}, {pipeline_mode = #tpu.pipeline_mode<synchronous>, transform_indices = @transform_3, window_bounds = array<i64: 128, 128>}, {pipeline_mode = #tpu.pipeline_mode<synchronous>, transform_indices = @transform_4, window_bounds = array<i64: 1, 128>}, {pipeline_mode = #tpu.pipeline_mode<synchronous>, transform_indices = @transform_5, window_bounds = array<i64: 128, 128>}, {pipeline_mode = #tpu.pipeline_mode<synchronous>, transform_indices = @transform_6, window_bounds = array<i64: 1, 128>}, {transform_indices = @transform_7, window_bounds = array<i64: 16, 128>}]} {
    %c0 = arith.constant 0 : index
    %c0_0 = arith.constant 0 : index
    %0 = vector.load %arg1[%c0, %c0_0] : memref<16x32xf32, #tpu.memory_space<vmem>>, vector<16x32xf32>
    %c0_1 = arith.constant 0 : index
    %c0_2 = arith.constant 0 : index
    %1 = vector.load %arg2[%c0_1, %c0_2] : memref<32x128xf32, #tpu.memory_space<vmem>>, vector<32x128xf32>
    %cst = arith.constant dense<0.000000e+00> : vector<16x128xf32>
    %2 = tpu.matmul %0, %1, %cst {dimension_numbers = #tpu.dot_dimension_numbers<[1], [0], [0], [1], [0, 0, 1, 1], [], []>} : vector<16x32xf32>, vector<32x128xf32>, vector<16x128xf32> -> vector<16x128xf32>
    %c0_3 = arith.constant 0 : index
    %c0_4 = arith.constant 0 : index
    %3 = vector.load %arg3[%c0_3, %c0_4] : memref<1x128xf32, #tpu.memory_space<vmem>>, vector<1x128xf32>
    %4 = vector.broadcast %3 : vector<1x128xf32> to vector<16x128xf32>
    %5 = arith.addf %2, %4 : vector<16x128xf32>
    %6 = math.tanh %5 : vector<16x128xf32>
    %c0_5 = arith.constant 0 : index
    %c0_6 = arith.constant 0 : index
    %7 = vector.load %arg4[%c0_5, %c0_6] : memref<128x128xf32, #tpu.memory_space<vmem>>, vector<128x128xf32>
    %cst_7 = arith.constant dense<0.000000e+00> : vector<16x128xf32>
    %8 = tpu.matmul %6, %7, %cst_7 {dimension_numbers = #tpu.dot_dimension_numbers<[1], [0], [0], [1], [0, 0, 1, 1], [], []>} : vector<16x128xf32>, vector<128x128xf32>, vector<16x128xf32> -> vector<16x128xf32>
    %c0_8 = arith.constant 0 : index
    %c0_9 = arith.constant 0 : index
    %9 = vector.load %arg5[%c0_8, %c0_9] : memref<1x128xf32, #tpu.memory_space<vmem>>, vector<1x128xf32>
    %10 = vector.broadcast %9 : vector<1x128xf32> to vector<16x128xf32>
    %11 = arith.addf %8, %10 : vector<16x128xf32>
    %12 = math.tanh %11 : vector<16x128xf32>
    %c0_10 = arith.constant 0 : index
    %c0_11 = arith.constant 0 : index
    %13 = vector.load %arg6[%c0_10, %c0_11] : memref<128x128xf32, #tpu.memory_space<vmem>>, vector<128x128xf32>
    %cst_12 = arith.constant dense<0.000000e+00> : vector<16x128xf32>
    %14 = tpu.matmul %12, %13, %cst_12 {dimension_numbers = #tpu.dot_dimension_numbers<[1], [0], [0], [1], [0, 0, 1, 1], [], []>} : vector<16x128xf32>, vector<128x128xf32>, vector<16x128xf32> -> vector<16x128xf32>
    %c0_13 = arith.constant 0 : index
    %c0_14 = arith.constant 0 : index
    %15 = vector.load %arg7[%c0_13, %c0_14] : memref<1x128xf32, #tpu.memory_space<vmem>>, vector<1x128xf32>
    %16 = vector.broadcast %15 : vector<1x128xf32> to vector<16x128xf32>
    %17 = arith.addf %14, %16 : vector<16x128xf32>
    %c0_15 = arith.constant 0 : index
    %c0_16 = arith.constant 0 : index
    %18 = vector.load %arg8[%c0_15, %c0_16] : memref<16x128xf32, #tpu.memory_space<vmem>>, vector<16x128xf32>
    tpu.vector_store %arg8[%c0_15, %c0_16], %17 {strides = array<i32>} : memref<16x128xf32, #tpu.memory_space<vmem>>, vector<16x128xf32>,
    return
  }
  func.func @transform_0(%arg0: i32) -> (i32, i32) {
    %c0_i32 = arith.constant 0 : i32
    %c0_i32_0 = arith.constant 0 : i32
    return %arg0, %c0_i32 : i32, i32
  }
  func.func @transform_1(%arg0: i32) -> (i32, i32) {
    %c0_i32 = arith.constant 0 : i32
    %c0_i32_0 = arith.constant 0 : i32
    %c0_i32_1 = arith.constant 0 : i32
    return %c0_i32, %c0_i32_0 : i32, i32
  }
  func.func @transform_2(%arg0: i32) -> (i32, i32) {
    %c0_i32 = arith.constant 0 : i32
    %c0_i32_0 = arith.constant 0 : i32
    %c0_i32_1 = arith.constant 0 : i32
    return %c0_i32, %c0_i32_0 : i32, i32
  }
  func.func @transform_3(%arg0: i32) -> (i32, i32) {
    %c0_i32 = arith.constant 0 : i32
    %c0_i32_0 = arith.constant 0 : i32
    %c0_i32_1 = arith.constant 0 : i32
    return %c0_i32, %c0_i32_0 : i32, i32
  }
  func.func @transform_4(%arg0: i32) -> (i32, i32) {
    %c0_i32 = arith.constant 0 : i32
    %c0_i32_0 = arith.constant 0 : i32
    %c0_i32_1 = arith.constant 0 : i32
    return %c0_i32, %c0_i32_0 : i32, i32
  }
  func.func @transform_5(%arg0: i32) -> (i32, i32) {
    %c0_i32 = arith.constant 0 : i32
    %c0_i32_0 = arith.constant 0 : i32
    %c0_i32_1 = arith.constant 0 : i32
    return %c0_i32, %c0_i32_0 : i32, i32
  }
  func.func @transform_6(%arg0: i32) -> (i32, i32) {
    %c0_i32 = arith.constant 0 : i32
    %c0_i32_0 = arith.constant 0 : i32
    %c0_i32_1 = arith.constant 0 : i32
    return %c0_i32, %c0_i32_0 : i32, i32
  }
  func.func @transform_7(%arg0: i32) -> (i32, i32) {
    %c0_i32 = arith.constant 0 : i32
    %c0_i32_0 = arith.constant 0 : i32
    return %arg0, %c0_i32 : i32, i32
  }
}

</mosaic_0001>

<llo_original>
// kernel: tpu_custom_call.1
$region0: #{tpu_custom_call.1}
  #allocation0 [shape = 'u32[]', space=smem, size = 0x4, offset = 0x4, fixed_abs, tag = 'smem constant byte address 0x4 - core index']
  #allocation1 [shape = 'u32[72,128]{1,0:T(1,128)}', space=vmem, size = 0x9000, scoped, tag = 'internal scratch']
  %s0 = inlined_call_operand.hbm [shape: f32[16,32], index: 0, kind: input, shape index: {}]
  %s1 = inlined_call_operand.hbm [shape: f32[32,128], index: 1, kind: input, shape index: {}]
  %s2 = inlined_call_operand.vmem [shape: f32[1,128], index: 2, kind: input, shape index: {}]
  %s3 = inlined_call_operand.hbm [shape: f32[128,128], index: 3, kind: input, shape index: {}]
  %s4 = inlined_call_operand.vmem [shape: f32[1,128], index: 4, kind: input, shape index: {}]
  %s5 = inlined_call_operand.hbm [shape: f32[128,128], index: 5, kind: input, shape index: {}]
  %s6 = inlined_call_operand.vmem [shape: f32[1,128], index: 6, kind: input, shape index: {}]
  %s7 = inlined_call_operand.hbm [shape: f32[16,128], index: 7, kind: output, shape index: {}]
  %s8 = sld [smem:[#allocation0]]
  $region54: #{tpu_custom_call.1} parent=0
    _
  %s10 = ssub.s32 1, %s8
  %s11 = scalar_select 0, %s10, %s8
  $region1: #{tpu_custom_call.1} parent=0
    #allocation2 [shape = 'u8[8192]{0}', space=vmem, size = 0x2000, scoped, tag = 'input window, operand 0, single buffered']
    #allocation3 [shape = 's32[1]{0}', space=sflag, size = 0x4, scoped, tag = 'scoped memory for tpu_custom_call.1']
    #allocation4 [shape = 's32[1]{0}', space=sflag, size = 0x4, scoped, tag = 'scoped memory for tpu_custom_call.1']
    #allocation5 [shape = 'u8[16384]{0}', space=vmem, size = 0x4000, scoped, tag = 'input window, operand 1, single buffered']
    #allocation6 [shape = 's32[1]{0}', space=sflag, size = 0x4, scoped, tag = 'scoped memory for tpu_custom_call.1']
    #allocation7 [shape = 'u8[65536]{0}', space=vmem, size = 0x10000, scoped, tag = 'input window, operand 3, single buffered']
    #allocation8 [shape = 'u8[65536]{0}', space=vmem, size = 0x10000, scoped, tag = 'input window, operand 5, single buffered']
    #allocation9 [shape = 's32[1]{0}', space=sflag, size = 0x4, scoped, tag = 'scoped memory for tpu_custom_call.1']
    #allocation10 [shape = 'u8[8192]{0}', space=vmem, size = 0x2000, scoped, tag = 'output window, operand 0, single buffered']
    %12 = vsyncpa [#allocation3], 0
    %13 = vsyncpa [#allocation6], 0
    %14 = vsyncpa [#allocation9], 0
    %15 = vsyncpa [#allocation4], 0
    // Predicated region
    $region2: #{tpu_custom_call.1} parent=1 // pred_check
      _
    $region3: #{tpu_custom_call.1} parent=1 // pred_check_branch
      %17 = sbr.rel (0) target = $region5
    $region4: #{tpu_custom_call.1} parent=1 // pred_region
      %19 = vsyncadd [#allocation3], 0
      %s20 = sshll.u32 %s0, 4
      %s21 = int_to_ptr.hbm [resolvable:$true] %s20
      %s22 = sshll.u32 [#allocation2], 4
      %s23 = int_to_ptr.vmem [resolvable:$true] %s22
      %28 = dma.hbm_to_vmem [thread:$0]  %s21, 256, %s23, [#allocation3], 128, 128, 8
    $region5: #{tpu_custom_call.1} parent=1 // pred_fallthru
      _
    // Predicated region
    $region6: #{tpu_custom_call.1} parent=1 // pred_check
      _
    $region7: #{tpu_custom_call.1} parent=1 // pred_check_branch
      %30 = sbr.rel (0) target = $region9
    $region8: #{tpu_custom_call.1} parent=1 // pred_region
      %32 = vsyncadd [#allocation6], 0
      %s33 = sshll.u32 %s1, 4
      %s34 = int_to_ptr.hbm [resolvable:$true] %s33
      %s35 = sshll.u32 [#allocation5], 4
      %s36 = int_to_ptr.vmem [resolvable:$true] %s35
      %41 = dma.hbm_to_vmem [thread:$0]  %s34, 512, %s36, [#allocation6], 128, 128, 8
    $region9: #{tpu_custom_call.1} parent=1 // pred_fallthru
      _
    // Predicated region
    $region10: #{tpu_custom_call.1} parent=1 // pred_check
      _
    $region11: #{tpu_custom_call.1} parent=1 // pred_check_branch
      %43 = sbr.rel (0) target = $region13
    $region12: #{tpu_custom_call.1} parent=1 // pred_region
      _
    $region13: #{tpu_custom_call.1} parent=1 // pred_fallthru
      _
    // Predicated region
    $region14: #{tpu_custom_call.1} parent=1 // pred_check
      _
    $region15: #{tpu_custom_call.1} parent=1 // pred_check_branch
      %45 = sbr.rel (0) target = $region17
    $region16: #{tpu_custom_call.1} parent=1 // pred_region
      %47 = vsyncadd [#allocation6], 0
      %s48 = sshll.u32 %s3, 4
      %s49 = int_to_ptr.hbm [resolvable:$true] %s48
      %s50 = sshll.u32 [#allocation7], 4
      %s51 = int_to_ptr.vmem [resolvable:$true] %s50
      %56 = dma.hbm_to_vmem [thread:$0]  %s49, 2048, %s51, [#allocation6], 128, 128, 8
    $region17: #{tpu_custom_call.1} parent=1 // pred_fallthru
      _
    // Predicated region
    $region18: #{tpu_custom_call.1} parent=1 // pred_check
      _
    $region19: #{tpu_custom_call.1} parent=1 // pred_check_branch
      %58 = sbr.rel (0) target = $region21
    $region20: #{tpu_custom_call.1} parent=1 // pred_region
      _
    $region21: #{tpu_custom_call.1} parent=1 // pred_fallthru
      _
    // Predicated region
    $region22: #{tpu_custom_call.1} parent=1 // pred_check
      _
    $region23: #{tpu_custom_call.1} parent=1 // pred_check_branch
      %60 = sbr.rel (0) target = $region25
    $region24: #{tpu_custom_call.1} parent=1 // pred_region
      %62 = vsyncadd [#allocation9], 0
      %s63 = sshll.u32 %s5, 4
      %s64 = int_to_ptr.hbm [resolvable:$true] %s63
      %s65 = sshll.u32 [#allocation8], 4
      %s66 = int_to_ptr.vmem [resolvable:$true] %s65
      %71 = dma.hbm_to_vmem [thread:$0]  %s64, 2048, %s66, [#allocation9], 128, 128, 8
    $region25: #{tpu_custom_call.1} parent=1 // pred_fallthru
      _
    // Predicated region
    $region26: #{tpu_custom_call.1} parent=1 // pred_check
      _
    $region27: #{tpu_custom_call.1} parent=1 // pred_check_branch
      %73 = sbr.rel (0) target = $region29
    $region28: #{tpu_custom_call.1} parent=1 // pred_region
      _
    $region29: #{tpu_custom_call.1} parent=1 // pred_fallthru
      _
    // Predicated region
    $region30: #{tpu_custom_call.1} parent=1 // pred_check
      _
    $region31: #{tpu_custom_call.1} parent=1 // pred_check_branch
      %75 = sbr.rel (0) target = $region33
    $region32: #{tpu_custom_call.1} parent=1 // pred_region
      %77 = dma.done [#allocation3], 256
    $region33: #{tpu_custom_call.1} parent=1 // pred_fallthru
      _
    // Predicated region
    $region34: #{tpu_custom_call.1} parent=1 // pred_check
      _
    $region35: #{tpu_custom_call.1} parent=1 // pred_check_branch
      %79 = sbr.rel (0) target = $region37
    $region36: #{tpu_custom_call.1} parent=1 // pred_region
      %81 = dma.done [#allocation6], 512
    $region37: #{tpu_custom_call.1} parent=1 // pred_fallthru
      _
    // Predicated region
    $region38: #{tpu_custom_call.1} parent=1 // pred_check
      _
    $region39: #{tpu_custom_call.1} parent=1 // pred_check_branch
      %83 = sbr.rel (0) target = $region41
    $region40: #{tpu_custom_call.1} parent=1 // pred_region
      %85 = dma.done [#allocation6], 2048
    $region41: #{tpu_custom_call.1} parent=1 // pred_fallthru
      _
    // Predicated region
    $region42: #{tpu_custom_call.1} parent=1 // pred_check
      _
    $region43: #{tpu_custom_call.1} parent=1 // pred_check_branch
      %87 = sbr.rel (0) target = $region45
    $region44: #{tpu_custom_call.1} parent=1 // pred_region
      %89 = dma.done [#allocation9], 2048
    $region45: #{tpu_custom_call.1} parent=1 // pred_fallthru
      _
    %v90 = vld [vmem:[#allocation2] sm:$0xff]
    %v91 = vld [vmem:[#allocation2 + $0x8] sm:$0xff]
    %v92 = vld [vmem:[#allocation5] sm:$0xff]
    %v93 = vld [vmem:[#allocation5 + $0x8] sm:$0xff]
    %v94 = vld [vmem:[#allocation5 + $0x10] sm:$0xff]
    %v95 = vld [vmem:[#allocation5 + $0x18] sm:$0xff]
    %v96 = vld [vmem:[%s2] sm:$0x1]
    %v98 = vperm.slane %v96, 0
    %vm100 = vcmask 261120
    %v102 = vsel %vm100, %v90, 0
    %v105 = vsel %vm100, %v91, 0
    %107 = vmatpush.msra.mxu0 0.0
    %108 = vmatpush.msra.mxu0 0.0
    %109 = vmatpush.msra.mxu0 0.0
    %110 = vmatpush.msra.mxu0 0.0
    %111 = vmatpush.msra.mxu0 0.0
    %112 = vmatpush.msra.mxu0 0.0
    %113 = vmatpush.msra.mxu0 0.0
    %114 = vmatpush.msra.mxu0 0.0
    %115 = vmatpush.msra.mxu0 0.0
    %116 = vmatpush.msra.mxu0 0.0
    %117 = vmatpush.msra.mxu0 0.0
    %118 = vmatpush.msra.mxu0 0.0
    %119 = vmatpush.msra.mxu0 %v95
    %120 = vmatpush.msra.mxu0 %v94
    %121 = vmatpush.msra.mxu0 %v93
    %122 = vmatpush.msra.mxu0 %v92
    %123 = vmatmul.f32.gmra.mxu0 %v102
    %v124 = vpop.f32.mrf.mxu0
    %v125 = vadd.f32 %v98, %v124
    %126 = vmatmul.f32.gmra.mxu0 %v105
    %v127 = vpop.f32.mrf.mxu0
    %v128 = vadd.f32 %v98, %v127
    %129 = vdwg.mxu0
    %v130 = vtanh.pop %v125
    %v131 = vtanh.pop %v128
    %v132 = vld [vmem:[#allocation7] sm:$0xff]
    %v133 = vld [vmem:[#allocation7 + $0x8] sm:$0xff]
    %v134 = vld [vmem:[#allocation7 + $0x10] sm:$0xff]
    %v135 = vld [vmem:[#allocation7 + $0x18] sm:$0xff]
    %v136 = vld [vmem:[#allocation7 + $0x20] sm:$0xff]
    %v137 = vld [vmem:[#allocation7 + $0x28] sm:$0xff]
    %v138 = vld [vmem:[#allocation7 + $0x30] sm:$0xff]
    %v139 = vld [vmem:[#allocation7 + $0x38] sm:$0xff]
    %v140 = vld [vmem:[#allocation7 + $0x40] sm:$0xff]
    %v141 = vld [vmem:[#allocation7 + $0x48] sm:$0xff]
    %v142 = vld [vmem:[#allocation7 + $0x50] sm:$0xff]
    %v143 = vld [vmem:[#allocation7 + $0x58] sm:$0xff]
    %v144 = vld [vmem:[#allocation7 + $0x60] sm:$0xff]
    %v145 = vld [vmem:[#allocation7 + $0x68] sm:$0xff]
    %v146 = vld [vmem:[#allocation7 + $0x70] sm:$0xff]
    %v147 = vld [vmem:[#allocation7 + $0x78] sm:$0xff]
    %v148 = vld [vmem:[%s4] sm:$0x1]
    %v150 = vperm.slane %v148, 0
    %152 = vmatpush.msra.mxu0 %v147
    %153 = vmatpush.msra.mxu0 %v146
    %154 = vmatpush.msra.mxu0 %v145
    %155 = vmatpush.msra.mxu0 %v144
    %156 = vmatpush.msra.mxu0 %v143
    %157 = vmatpush.msra.mxu0 %v142
    %158 = vmatpush.msra.mxu0 %v141
    %159 = vmatpush.msra.mxu0 %v140
    %160 = vmatpush.msra.mxu0 %v139
    %161 = vmatpush.msra.mxu0 %v138
    %162 = vmatpush.msra.mxu0 %v137
    %163 = vmatpush.msra.mxu0 %v136
    %164 = vmatpush.msra.mxu0 %v135
    %165 = vmatpush.msra.mxu0 %v134
    %166 = vmatpush.msra.mxu0 %v133
    %167 = vmatpush.msra.mxu0 %v132
    %168 = vmatmul.f32.gmra.mxu0 %v130
    %v169 = vpop.f32.mrf.mxu0
    %v170 = vadd.f32 %v150, %v169
    %171 = vmatmul.f32.gmra.mxu0 %v131
    %v172 = vpop.f32.mrf.mxu0
    %v173 = vadd.f32 %v150, %v172
    %174 = vdwg.mxu0
    %v175 = vtanh.pop %v170
    %v176 = vtanh.pop %v173
    %v177 = vld [vmem:[#allocation8] sm:$0xff]
    %v178 = vld [vmem:[#allocation8 + $0x8] sm:$0xff]
    %v179 = vld [vmem:[#allocation8 + $0x10] sm:$0xff]
    %v180 = vld [vmem:[#allocation8 + $0x18] sm:$0xff]
    %v181 = vld [vmem:[#allocation8 + $0x20] sm:$0xff]
    %v182 = vld [vmem:[#allocation8 + $0x28] sm:$0xff]
    %v183 = vld [vmem:[#allocation8 + $0x30] sm:$0xff]
    %v184 = vld [vmem:[#allocation8 + $0x38] sm:$0xff]
    %v185 = vld [vmem:[#allocation8 + $0x40] sm:$0xff]
    %v186 = vld [vmem:[#allocation8 + $0x48] sm:$0xff]
    %v187 = vld [vmem:[#allocation8 + $0x50] sm:$0xff]
    %v188 = vld [vmem:[#allocation8 + $0x58] sm:$0xff]
    %v189 = vld [vmem:[#allocation8 + $0x60] sm:$0xff]
    %v190 = vld [vmem:[#allocation8 + $0x68] sm:$0xff]
    %v191 = vld [vmem:[#allocation8 + $0x70] sm:$0xff]
    %v192 = vld [vmem:[#allocation8 + $0x78] sm:$0xff]
    %v193 = vld [vmem:[%s6] sm:$0x1]
    %v195 = vperm.slane %v193, 0
    %197 = vmatpush.msra.mxu0 %v192
    %198 = vmatpush.msra.mxu0 %v191
    %199 = vmatpush.msra.mxu0 %v190
    %200 = vmatpush.msra.mxu0 %v189
    %201 = vmatpush.msra.mxu0 %v188
    %202 = vmatpush.msra.mxu0 %v187
    %203 = vmatpush.msra.mxu0 %v186
    %204 = vmatpush.msra.mxu0 %v185
    %205 = vmatpush.msra.mxu0 %v184
    %206 = vmatpush.msra.mxu0 %v183
    %207 = vmatpush.msra.mxu0 %v182
    %208 = vmatpush.msra.mxu0 %v181
    %209 = vmatpush.msra.mxu0 %v180
    %210 = vmatpush.msra.mxu0 %v179
    %211 = vmatpush.msra.mxu0 %v178
    %212 = vmatpush.msra.mxu0 %v177
    %213 = vmatmul.f32.gmra.mxu0 %v175
    %v214 = vpop.f32.mrf.mxu0
    %v215 = vadd.f32 %v195, %v214
    %216 = vmatmul.f32.gmra.mxu0 %v176
    %v217 = vpop.f32.mrf.mxu0
    %v218 = vadd.f32 %v195, %v217
    %219 = vdwg.mxu0
    %220 = vst [vmem:[#allocation10] sm:$0xff] %v215
    %221 = vst [vmem:[#allocation10 + $0x8] sm:$0xff] %v218
    // Predicated region
    $region46: #{tpu_custom_call.1} parent=1 // pred_check
      _
    $region47: #{tpu_custom_call.1} parent=1 // pred_check_branch
      %223 = sbr.rel (0) target = $region49
    $region48: #{tpu_custom_call.1} parent=1 // pred_region
      %225 = vsyncadd [#allocation4], 0
      %s226 = sshll.u32 [#allocation10], 4
      %s227 = int_to_ptr.vmem [resolvable:$true] %s226
      %s228 = sshll.u32 %s7, 4
      %s229 = int_to_ptr.hbm [resolvable:$true] %s228
      %234 = dma.vmem_to_hbm [thread:$0]  %s227, 256, %s229, [#allocation4], 128, 128, 8
    $region49: #{tpu_custom_call.1} parent=1 // pred_fallthru
      _
    // Predicated region
    $region50: #{tpu_custom_call.1} parent=1 // pred_check
      _
    $region51: #{tpu_custom_call.1} parent=1 // pred_check_branch
      %236 = sbr.rel (0) target = $region53
    $region52: #{tpu_custom_call.1} parent=1 // pred_region
      %238 = dma.done [#allocation4], 256
    $region53: #{tpu_custom_call.1} parent=1 // pred_fallthru
      _
    %239 = vsyncpa [#allocation3], 1
    %240 = vsyncpa [#allocation6], 1
    %241 = vsyncpa [#allocation9], 1
    %242 = vsyncpa [#allocation4], 1

</llo_original>
